<compile_context>
chip_gen: v7x
topology: tpu7x:2x2x1
jax: 0.10.0
libtpu: 0.0.40
codegen_flags: <defaults>
</compile_context>

<pallas_src>
import jax
import jax.numpy as jnp
from jax import lax
from jax.experimental import pallas as pl
from jax.experimental.pallas import tpu as pltpu


# 48 MiB: leaves headroom under v7x's 64 MiB/TC physical VMEM, raises v5e/v6e defaults.
_VMEM_LIMIT_BYTES = 48 * 1024 * 1024


def _round_up(x, m):
    return ((x + m - 1) // m) * m


# ---------------- Kernel 1: Linear projection y = x @ W + b ----------------
def _linear_kernel(x_ref, w_ref, b_ref, o_ref):
    y = jnp.dot(x_ref[...], w_ref[...], preferred_element_type=jnp.float32)
    o_ref[...] = (y + b_ref[...]).astype(o_ref.dtype)


def linear_pallas(x, w, b, *, tile_rows=512, out_dtype=None):
    n, cin = x.shape
    cout = w.shape[1]
    out_dtype = x.dtype if out_dtype is None else out_dtype

    tr = min(tile_rows, _round_up(n, 8))
    grid = pl.cdiv(n, tr)                       # partial edge block handled by Pallas
    b2d = b.astype(jnp.float32).reshape(1, cout)

    return pl.pallas_call(
        _linear_kernel,
        out_shape=jax.ShapeDtypeStruct((n, cout), out_dtype),
        grid_spec=pltpu.PrefetchScalarGridSpec(
            num_scalar_prefetch=0,
            grid=(grid,),
            in_specs=[
                pl.BlockSpec((tr, cin), lambda i: (i, 0)),     # row tile of x
                pl.BlockSpec((cin, cout), lambda i: (0, 0)),   # W   (resident)
                pl.BlockSpec((1, cout), lambda i: (0, 0)),     # bias (resident)
            ],
            out_specs=pl.BlockSpec((tr, cout), lambda i: (i, 0)),
        ),
        compiler_params=pltpu.CompilerParams(
            dimension_semantics=("parallel",),
            vmem_limit_bytes=_VMEM_LIMIT_BYTES,
        ),
    )(x, w, b2d)


# ------- Kernel 2: skip projection + indexed gather of point_proj + residual add -------
def _unpool_kernel(cl_ref, skip_ref, w_ref, b_ref, point_ref, o_ref, gath_ref):
    tr = o_ref.shape[0]
    n_src = point_ref.shape[0]
    base = pl.program_id(0) * tr                # hoisted out of the gather loop

    # Indexed row gather: SMEM-prefetched cluster indices drive dynamic sublane loads
    # from the VMEM-resident point_proj into an fp32 scratch tile.  Unrolled so the
    # per-row scalar read / vld / vst can be co-issued by the scheduler.
    def gather_row(r, carry):
        src = jnp.clip(cl_ref[base + r], 0, n_src - 1)          # safety clamp
        gath_ref[pl.ds(r, 1), :] = point_ref[pl.ds(src, 1), :].astype(jnp.float32)
        return carry

    lax.fori_loop(0, tr, gather_row, 0, unroll=8)

    parent = jnp.dot(skip_ref[...], w_ref[...],
                     preferred_element_type=jnp.float32) + b_ref[...]
    o_ref[...] = (parent + gath_ref[...]).astype(o_ref.dtype)


def unpool_pallas(skip_feat, w_skip, b_skip, point_proj, cluster, *, tile_rows=512):
    m, cskip = skip_feat.shape
    n, cout = point_proj.shape
    out_dtype = skip_feat.dtype

    tr = min(tile_rows, _round_up(m, 8))
    grid = pl.cdiv(m, tr)

    # Pad ONLY the tiny index vector (so cl_ref[base+r] stays in bounds for the
    # partial last tile).  Feature arrays / output are NOT padded; Pallas masks
    # the partial edge blocks.
    cluster = cluster.astype(jnp.int32)
    m_pad = grid * tr
    if m_pad != m:
        cluster = jnp.pad(cluster, (0, m_pad - m))   # pad value 0 = valid row index

    b2d = b_skip.astype(jnp.float32).reshape(1, cout)

    return pl.pallas_call(
        _unpool_kernel,
        out_shape=jax.ShapeDtypeStruct((m, cout), out_dtype),
        grid_spec=pltpu.PrefetchScalarGridSpec(
            num_scalar_prefetch=1,                                 # cluster -> SMEM
            grid=(grid,),
            in_specs=[
                pl.BlockSpec((tr, cskip), lambda i, cl: (i, 0)),   # parent feat tile
                pl.BlockSpec((cskip, cout), lambda i, cl: (0, 0)), # W_skip (resident)
                pl.BlockSpec((1, cout), lambda i, cl: (0, 0)),     # b_skip (resident)
                pl.BlockSpec((n, cout), lambda i, cl: (0, 0)),     # point_proj (resident)
            ],
            out_specs=pl.BlockSpec((tr, cout), lambda i, cl: (i, 0)),
            scratch_shapes=[pltpu.VMEM((tr, cout), jnp.float32)],  # gathered rows (fp32)
        ),
        compiler_params=pltpu.CompilerParams(
            dimension_semantics=("parallel",),
            vmem_limit_bytes=_VMEM_LIMIT_BYTES,
        ),
    )(cluster, skip_feat, w_skip, b2d, point_proj)


# ---------------------------- SerializedUnpooling forward ----------------------------
def serialized_unpooling_forward(point_feat, parent_feat, cluster, params,
                                 *, tile_rows=512, point_proj_dtype=None):
    """point_feat: (N, in_ch)  parent_feat: (M, skip_ch)  cluster: (M,) int in [0, N)

    point_proj_dtype: dtype used to store the intermediate point projection
    (e.g. jnp.bfloat16 on v6e/v7x to halve its HBM round trip); residual add stays fp32.
    """
    point_proj = linear_pallas(point_feat, params["w_proj"], params["b_proj"],
                               tile_rows=tile_rows, out_dtype=point_proj_dtype)
    return unpool_pallas(parent_feat, params["w_proj_skip"], params["b_proj_skip"],
                         point_proj, cluster, tile_rows=tile_rows)


def init_params(key, in_channels, skip_channels, out_channels):
    k1, k2, k3, k4 = jax.random.split(key, 4)
    scale_p = 1.0 / jnp.sqrt(in_channels)
    scale_s = 1.0 / jnp.sqrt(skip_channels)
    return {
        "w_proj": jax.random.uniform(k1, (in_channels, out_channels),
                                     jnp.float32, -scale_p, scale_p),
        "b_proj": jax.random.uniform(k2, (out_channels,), jnp.float32,
                                     -scale_p, scale_p),
        "w_proj_skip": jax.random.uniform(k3, (skip_channels, out_channels),
                                          jnp.float32, -scale_s, scale_s),
        "b_proj_skip": jax.random.uniform(k4, (out_channels,), jnp.float32,
                                          -scale_s, scale_s),
    }


if __name__ == "__main__":
    # Small shapes consistent with the module: N pooled points, M parent points.
    N, M = 16, 32
    in_channels, skip_channels, out_channels = 64, 32, 128

    key = jax.random.PRNGKey(0)
    k_pf, k_sf, k_cl, k_par = jax.random.split(key, 4)

    point_feat = jax.random.normal(k_pf, (N, in_channels), jnp.float32)
    parent_feat = jax.random.normal(k_sf, (M, skip_channels), jnp.float32)
    cluster = jax.random.randint(k_cl, (M,), 0, N, jnp.int32)
    params = init_params(k_par, in_channels, skip_channels, out_channels)

    out = serialized_unpooling_forward(point_feat, parent_feat, cluster, params)
    out = jax.block_until_ready(out)

    # Pure-JAX reference for verification.
    point_proj_ref = point_feat @ params["w_proj"] + params["b_proj"]
    parent_proj_ref = parent_feat @ params["w_proj_skip"] + params["b_proj_skip"]
    ref = parent_proj_ref + point_proj_ref[cluster]

    assert out.shape == (M, out_channels)
    # Tolerance accounts for MXU matmul pass-precision differences vs the XLA reference.
    assert jnp.allclose(out, ref, atol=1e-2, rtol=1e-2)
    print("KERNEL_OK")
</pallas_src>

<mosaic_0001>
module attributes {stable_mosaic.version = 11 : i64} {
  func.func @_linear_kernel(%arg0: i32, %arg1: memref<16x64xf32, #tpu.memory_space<vmem>>, %arg2: memref<64x128xf32, #tpu.memory_space<vmem>>, %arg3: memref<1x128xf32, #tpu.memory_space<vmem>>, %arg4: memref<16x128xf32, #tpu.memory_space<vmem>>) attributes {dimension_semantics = [#tpu.dimension_semantics<parallel>], iteration_bounds = array<i64: 1>, scalar_prefetch = 0 : i64, scratch_operands = 0 : i64, tpu.core_type = #tpu.core_type<tc>, window_params = [{transform_indices = @transform_0, window_bounds = array<i64: 16, 64>}, {pipeline_mode = #tpu.pipeline_mode<synchronous>, transform_indices = @transform_1, window_bounds = array<i64: 64, 128>}, {pipeline_mode = #tpu.pipeline_mode<synchronous>, transform_indices = @transform_2, window_bounds = array<i64: 1, 128>}, {transform_indices = @transform_3, window_bounds = array<i64: 16, 128>}]} {
    %c0 = arith.constant 0 : index
    %c0_0 = arith.constant 0 : index
    %0 = vector.load %arg1[%c0, %c0_0] : memref<16x64xf32, #tpu.memory_space<vmem>>, vector<16x64xf32>
    %c0_1 = arith.constant 0 : index
    %c0_2 = arith.constant 0 : index
    %1 = vector.load %arg2[%c0_1, %c0_2] : memref<64x128xf32, #tpu.memory_space<vmem>>, vector<64x128xf32>
    %cst = arith.constant dense<0.000000e+00> : vector<16x128xf32>
    %2 = tpu.matmul %0, %1, %cst {dimension_numbers = #tpu.dot_dimension_numbers<[1], [0], [0], [1], [0, 0, 1, 1], [], []>} : vector<16x64xf32>, vector<64x128xf32>, vector<16x128xf32> -> vector<16x128xf32>
    %c0_3 = arith.constant 0 : index
    %c0_4 = arith.constant 0 : index
    %3 = vector.load %arg3[%c0_3, %c0_4] : memref<1x128xf32, #tpu.memory_space<vmem>>, vector<1x128xf32>
    %4 = vector.broadcast %3 : vector<1x128xf32> to vector<16x128xf32>
    %5 = arith.addf %2, %4 : vector<16x128xf32>
    %c0_5 = arith.constant 0 : index
    %c0_6 = arith.constant 0 : index
    %6 = vector.load %arg4[%c0_5, %c0_6] : memref<16x128xf32, #tpu.memory_space<vmem>>, vector<16x128xf32>
    tpu.vector_store %arg4[%c0_5, %c0_6], %5 {strides = array<i32>} : memref<16x128xf32, #tpu.memory_space<vmem>>, vector<16x128xf32>,
    return
  }
  func.func @transform_0(%arg0: i32) -> (i32, i32) {
    %c0_i32 = arith.constant 0 : i32
    %c0_i32_0 = arith.constant 0 : i32
    return %arg0, %c0_i32 : i32, i32
  }
  func.func @transform_1(%arg0: i32) -> (i32, i32) {
    %c0_i32 = arith.constant 0 : i32
    %c0_i32_0 = arith.constant 0 : i32
    %c0_i32_1 = arith.constant 0 : i32
    return %c0_i32, %c0_i32_0 : i32, i32
  }
  func.func @transform_2(%arg0: i32) -> (i32, i32) {
    %c0_i32 = arith.constant 0 : i32
    %c0_i32_0 = arith.constant 0 : i32
    %c0_i32_1 = arith.constant 0 : i32
    return %c0_i32, %c0_i32_0 : i32, i32
  }
  func.func @transform_3(%arg0: i32) -> (i32, i32) {
    %c0_i32 = arith.constant 0 : i32
    %c0_i32_0 = arith.constant 0 : i32
    return %arg0, %c0_i32 : i32, i32
  }
}

</mosaic_0001>

<llo_original>
// kernel: tpu_custom_call.1
$region0: #{tpu_custom_call.1}
  #allocation0 [shape = 'u32[]', space=smem, size = 0x4, offset = 0x4, fixed_abs, tag = 'smem constant byte address 0x4 - core index']
  #allocation1 [shape = 'u32[144,128]{1,0:T(1,128)}', space=vmem, size = 0x12000, scoped, tag = 'internal scratch']
  %s0 = inlined_call_operand.hbm [shape: f32[16,64], index: 0, kind: input, shape index: {}]
  %s1 = inlined_call_operand.hbm [shape: f32[64,128], index: 1, kind: input, shape index: {}]
  %s2 = inlined_call_operand.vmem [shape: f32[1,128], index: 2, kind: input, shape index: {}]
  %s3 = inlined_call_operand.hbm [shape: f32[16,128], index: 3, kind: output, shape index: {}]
  %s4 = sld [smem:[#allocation0]]
  $region30: #{tpu_custom_call.1} parent=0
    _
  %s6 = ssub.s32 1, %s4
  %s7 = scalar_select 0, %s6, %s4
  $region1: #{tpu_custom_call.1} parent=0
    #allocation2 [shape = 'u8[8192]{0}', space=vmem, size = 0x2000, scoped, tag = 'input window, operand 0, single buffered']
    #allocation3 [shape = 's32[1]{0}', space=sflag, size = 0x4, scoped, tag = 'scoped memory for tpu_custom_call.1']
    #allocation4 [shape = 's32[1]{0}', space=sflag, size = 0x4, scoped, tag = 'scoped memory for tpu_custom_call.1']
    #allocation5 [shape = 'u8[32768]{0}', space=vmem, size = 0x8000, scoped, tag = 'input window, operand 1, single buffered']
    #allocation6 [shape = 's32[1]{0}', space=sflag, size = 0x4, scoped, tag = 'scoped memory for tpu_custom_call.1']
    #allocation7 [shape = 'u8[8192]{0}', space=vmem, size = 0x2000, scoped, tag = 'output window, operand 0, single buffered']
    %8 = vsyncpa [#allocation3], 0
    %9 = vsyncpa [#allocation6], 0
    %10 = vsyncpa [#allocation4], 0
    // Predicated region
    $region2: #{tpu_custom_call.1} parent=1 // pred_check
      _
    $region3: #{tpu_custom_call.1} parent=1 // pred_check_branch
      %12 = sbr.rel (0) target = $region5
    $region4: #{tpu_custom_call.1} parent=1 // pred_region
      %s14 = ssub.s32 256, 256
      %15 = vsyncadd [#allocation3], %s14
      %s16 = sshll.u32 [#allocation2], 4
      %s17 = int_to_ptr.vmem [resolvable:$true] %s16
      %22 = dma.hbm_to_vmem [thread:$0]  %s0, 256, %s17, [#allocation3], 128, 128, 8
    $region5: #{tpu_custom_call.1} parent=1 // pred_fallthru
      _
    // Predicated region
    $region6: #{tpu_custom_call.1} parent=1 // pred_check
      _
    $region7: #{tpu_custom_call.1} parent=1 // pred_check_branch
      %24 = sbr.rel (0) target = $region9
    $region8: #{tpu_custom_call.1} parent=1 // pred_region
      %s26 = ssub.s32 1024, 1024
      %27 = vsyncadd [#allocation6], %s26
      %s28 = sshll.u32 [#allocation5], 4
      %s29 = int_to_ptr.vmem [resolvable:$true] %s28
      %34 = dma.hbm_to_vmem [thread:$0]  %s1, 1024, %s29, [#allocation6], 128, 128, 8
    $region9: #{tpu_custom_call.1} parent=1 // pred_fallthru
      _
    // Predicated region
    $region10: #{tpu_custom_call.1} parent=1 // pred_check
      _
    $region11: #{tpu_custom_call.1} parent=1 // pred_check_branch
      %36 = sbr.rel (0) target = $region13
    $region12: #{tpu_custom_call.1} parent=1 // pred_region
      _
    $region13: #{tpu_custom_call.1} parent=1 // pred_fallthru
      _
    // Predicated region
    $region14: #{tpu_custom_call.1} parent=1 // pred_check
      _
    $region15: #{tpu_custom_call.1} parent=1 // pred_check_branch
      %38 = sbr.rel (0) target = $region17
    $region16: #{tpu_custom_call.1} parent=1 // pred_region
      %39 = dma.done [#allocation3], 256
    $region17: #{tpu_custom_call.1} parent=1 // pred_fallthru
      _
    // Predicated region
    $region18: #{tpu_custom_call.1} parent=1 // pred_check
      _
    $region19: #{tpu_custom_call.1} parent=1 // pred_check_branch
      %41 = sbr.rel (0) target = $region21
    $region20: #{tpu_custom_call.1} parent=1 // pred_region
      %42 = dma.done [#allocation6], 1024
    $region21: #{tpu_custom_call.1} parent=1 // pred_fallthru
      _
    %v43 = vld [vmem:[#allocation2] sm:$0xff]
    %v44 = vld [vmem:[#allocation2 + $0x8] sm:$0xff]
    %v45 = vld [vmem:[#allocation5] sm:$0xff]
    %v46 = vld [vmem:[#allocation5 + $0x8] sm:$0xff]
    %v47 = vld [vmem:[#allocation5 + $0x10] sm:$0xff]
    %v48 = vld [vmem:[#allocation5 + $0x18] sm:$0xff]
    %v49 = vld [vmem:[#allocation5 + $0x20] sm:$0xff]
    %v50 = vld [vmem:[#allocation5 + $0x28] sm:$0xff]
    %v51 = vld [vmem:[#allocation5 + $0x30] sm:$0xff]
    %v52 = vld [vmem:[#allocation5 + $0x38] sm:$0xff]
    %v53 = vld [vmem:[%s2] sm:$0x1]
    %v55 = vlaneseq
    %v56 = vshrl.u32 %v55, 7
    %v57 = vsub.s32 0, %v56
    %v58 = vrot.slane %v53, %v57
    %vm60 = vcmask 523264
    %v62 = vsel %vm60, %v43, 0
    %v65 = vsel %vm60, %v44, 0
    %67 = vmatprep.subr.mxu0 0.0
    %68 = vmatpush1.msra.mxu0 %v45
    %69 = vmatprep.subr.mxu0 0.0
    %70 = vmatpush1.msra.mxu0 %v46
    %71 = vmatprep.subr.mxu0 0.0
    %72 = vmatpush1.msra.mxu0 %v47
    %73 = vmatprep.subr.mxu0 0.0
    %74 = vmatpush1.msra.mxu0 %v48
    %75 = vmatprep.subr.mxu0 0.0
    %76 = vmatpush1.msra.mxu0 %v49
    %77 = vmatprep.subr.mxu0 0.0
    %78 = vmatpush1.msra.mxu0 %v50
    %79 = vmatprep.subr.mxu0 0.0
    %80 = vmatpush1.msra.mxu0 %v51
    %81 = vmatprep.subr.mxu0 0.0
    %82 = vmatpush1.msra.mxu0 %v52
    %83 = vmatprep.subr.mxu0 0.0
    %84 = vmatpush1.msra.mxu0 0.0
    %85 = vmatprep.subr.mxu0 0.0
    %86 = vmatpush1.msra.mxu0 0.0
    %87 = vmatprep.subr.mxu0 0.0
    %88 = vmatpush1.msra.mxu0 0.0
    %89 = vmatprep.subr.mxu0 0.0
    %90 = vmatpush1.msra.mxu0 0.0
    %91 = vmatprep.subr.mxu0 0.0
    %92 = vmatpush1.msra.mxu0 0.0
    %93 = vmatprep.subr.mxu0 0.0
    %94 = vmatpush1.msra.mxu0 0.0
    %95 = vmatprep.subr.mxu0 0.0
    %96 = vmatpush1.msra.mxu0 0.0
    %97 = vmatprep.subr.mxu0 0.0
    %98 = vmatpush1.msra.mxu0 0.0
    %99 = vmatprep.subr.mxu0 0.0
    %100 = vmatpush1.msra.mxu0 0.0
    %101 = vmatprep.subr.mxu0 0.0
    %102 = vmatpush1.msra.mxu0 0.0
    %103 = vmatprep.subr.mxu0 0.0
    %104 = vmatpush1.msra.mxu0 0.0
    %105 = vmatprep.subr.mxu0 0.0
    %106 = vmatpush1.msra.mxu0 0.0
    %107 = vmatprep.subr.mxu0 0.0
    %108 = vmatpush1.msra.mxu0 0.0
    %109 = vmatprep.subr.mxu0 0.0
    %110 = vmatpush1.msra.mxu0 0.0
    %111 = vmatprep.subr.mxu0 0.0
    %112 = vmatpush1.msra.mxu0 0.0
    %113 = vmatprep.subr.mxu0 0.0
    %114 = vmatpush1.msra.mxu0 0.0
    %115 = vmatprep.subr.mxu0 0.0
    %116 = vmatpush1.msra.mxu0 0.0
    %117 = vmatprep.subr.mxu0 0.0
    %118 = vmatpush1.msra.mxu0 0.0
    %119 = vmatprep.subr.mxu0 0.0
    %120 = vmatpush1.msra.mxu0 0.0
    %121 = vmatprep.subr.mxu0 0.0
    %122 = vmatpush1.msra.mxu0 0.0
    %123 = vmatprep.subr.mxu0 0.0
    %124 = vmatpush1.msra.mxu0 0.0
    %125 = vmatprep.subr.mxu0 0.0
    %126 = vmatpush1.msra.mxu0 0.0
    %127 = vmatprep.subr.mxu0 0.0
    %128 = vmatpush1.msra.mxu0 0.0
    %129 = vmatprep.subr.mxu0 0.0
    %130 = vmatpush1.msra.mxu0 0.0
    %131 = vmatprep.mubr.f32.mxu0 0.0
    %132 = vmatmul.mubr.f32.gmra.mrb[0].mxu0 %v62
    %v133 = vpop.f32.mrb[0].mxu0
    %v134 = vadd.f32 %v58, %v133
    %v135 = vpop.f32.mrb[0].mxu0
    %136 = vmatprep.mubr.f32.mxu0 0.0
    %137 = vmatmul.mubr.f32.gmra.mrb[0].mxu0 %v65
    %v138 = vpop.f32.mrb[0].mxu0
    %v139 = vadd.f32 %v58, %v138
    %v140 = vpop.f32.mrb[0].mxu0
    %141 = vdwg.mxu0
    %142 = vst [vmem:[#allocation7] sm:$0xff] %v134
    %143 = vst [vmem:[#allocation7 + $0x8] sm:$0xff] %v139
    // Predicated region
    $region22: #{tpu_custom_call.1} parent=1 // pred_check
      _
    $region23: #{tpu_custom_call.1} parent=1 // pred_check_branch
      %145 = sbr.rel (0) target = $region25
    $region24: #{tpu_custom_call.1} parent=1 // pred_region
      %s147 = ssub.s32 256, 256
      %148 = vsyncadd [#allocation4], %s147
      %s149 = sshll.u32 [#allocation7], 4
      %s150 = int_to_ptr.vmem [resolvable:$true] %s149
      %155 = dma.vmem_to_hbm [thread:$0]  %s150, 256, %s3, [#allocation4], 128, 128, 8
    $region25: #{tpu_custom_call.1} parent=1 // pred_fallthru
      _
    // Predicated region
    $region26: #{tpu_custom_call.1} parent=1 // pred_check
      _
    $region27: #{tpu_custom_call.1} parent=1 // pred_check_branch
      %157 = sbr.rel (0) target = $region29
    $region28: #{tpu_custom_call.1} parent=1 // pred_region
      %158 = dma.done [#allocation4], 256
    $region29: #{tpu_custom_call.1} parent=1 // pred_fallthru
      _
    %159 = vsyncpa [#allocation3], 1
    %160 = vsyncpa [#allocation6], 1
    %161 = vsyncpa [#allocation4], 1

</llo_original>
